<compile_context>
chip_gen: v5e
topology: v5e:2x2
jax: 0.10.0
libtpu: 0.0.40
codegen_flags: <defaults>
</compile_context>

<pallas_src>
import functools

import jax
import jax.numpy as jnp
from jax import lax
from jax.experimental import pallas as pl
from jax.experimental.pallas import tpu as pltpu


def _bn_running_kernel(x_ref, gamma_ref, beta_ref,
                       xhat_ref, m_ref, v_ref,
                       *, eps, inv_n, inv_nm1):
    x = x_ref[...].astype(jnp.float32)            # (B, TILE_D)
    gamma = gamma_ref[...].astype(jnp.float32)    # (1, TILE_D)
    beta = beta_ref[...].astype(jnp.float32)      # (1, TILE_D)

    # Batch mean over dim 0; reuse diff for both the variance and x_hat.
    m = jnp.sum(x, axis=0, keepdims=True) * jnp.float32(inv_n)        # (1, TILE_D)
    diff = x - m
    # torch.var defaults to unbiased (divide by N-1); the module adds eps here
    # and the same eps-augmented v feeds the running_var update (matching the
    # custom module, not torch.nn.BatchNorm1d).
    v = jnp.sum(diff * diff, axis=0, keepdims=True) * jnp.float32(inv_nm1) + jnp.float32(eps)

    # Fold exp(gamma) into one per-column scale; exp/rsqrt run on the EUP slot.
    scale = jnp.exp(gamma) * lax.rsqrt(v)                              # (1, TILE_D)
    xhat_ref[...] = (diff * scale + beta).astype(xhat_ref.dtype)

    # Per-feature statistics; log_det and the running-stat lerp are done in
    # the wrapper on these (1, D) rows, so the D grid axis stays fully
    # parallel and the per-step small-DMA count stays minimal.
    m_ref[...] = m.astype(m_ref.dtype)
    v_ref[...] = v.astype(v_ref.dtype)


def _vmem_limit_bytes():
    """Generation-aware scoped-VMEM limit (v7x: 64 MiB phys, v5e/v6e: 128 MiB)."""
    cap = 64 * 1024 * 1024
    try:
        info = pltpu.get_tpu_info()
        cap = int(getattr(info, "vmem_capacity_bytes", cap))
    except Exception:
        pass
    # Leave ~25% headroom for compiler-internal scratch; never ask for more
    # than ~100 MiB even on 128 MiB parts.
    return int(min(cap * 3 // 4, 100 * 1024 * 1024))


def _pick_tile_d(B, D, x_itemsize, out_itemsize, vmem_limit_bytes):
    """Largest lane-dense tile_d whose double-buffered x / x_hat blocks fit."""
    d128 = pl.cdiv(D, 128) * 128
    # Dominant VMEM use per step: 2 buffers each of the x block and the x_hat
    # block (small (1, tile_d) rows are negligible).  Use ~60% of the scoped
    # limit as the budget for these streams.
    budget = int(vmem_limit_bytes * 0.6)
    per_col = 2 * B * (x_itemsize + out_itemsize)
    tile_d = max(128, (budget // max(per_col, 1)) // 128 * 128)
    tile_d = min(tile_d, d128)
    # Keep at least two grid blocks when D spans more than one 128-lane tile,
    # so v7x's second TensorCore gets a share of the "parallel" D axis.
    if tile_d >= d128 and d128 > 128:
        tile_d = max(128, pl.cdiv(d128 // 128, 2) * 128)
    return tile_d
    # TODO(synk): if B is so large that even a (B, 128) block blows the VMEM
    # budget, add a trailing "arbitrary" grid axis over B with sum / sum-of-
    # squares accumulators in VMEM scratch and a pl.when finalize.


def batch_norm_running_forward(x, gamma, beta, running_mean, running_var,
                               eps=1e-5, momentum=0.01):
    """Training-mode forward of BatchNorm_running.

    Returns (x_hat, log_det, new_running_mean, new_running_var).
    """
    B, D = x.shape

    vmem_limit = _vmem_limit_bytes()
    tile_d = _pick_tile_d(B, D, jnp.dtype(x.dtype).itemsize,
                          jnp.dtype(x.dtype).itemsize, vmem_limit)
    grid = (pl.cdiv(D, tile_d),)

    # B == 1 would divide by zero in the unbiased variance (torch returns NaN
    # there); guard the constant so tracing never crashes.
    kernel = functools.partial(_bn_running_kernel,
                               eps=float(eps),
                               inv_n=1.0 / B,
                               inv_nm1=1.0 / max(B - 1, 1))

    row_spec = pl.BlockSpec((1, tile_d), lambda j: (0, j))
    mat_spec = pl.BlockSpec((B, tile_d), lambda j: (0, j))

    out_shapes = (
        jax.ShapeDtypeStruct((B, D), x.dtype),       # x_hat
        jax.ShapeDtypeStruct((1, D), jnp.float32),   # batch mean m
        jax.ShapeDtypeStruct((1, D), jnp.float32),   # batch var v (+ eps)
    )

    x_hat, m, v = pl.pallas_call(
        kernel,
        out_shape=out_shapes,
        grid=grid,
        in_specs=[mat_spec, row_spec, row_spec],
        out_specs=(mat_spec, row_spec, row_spec),
        compiler_params=pltpu.CompilerParams(
            dimension_semantics=("parallel",),
            vmem_limit_bytes=vmem_limit,
        ),
    )(x, gamma, beta)

    # Tiny (1, D) epilogue ops; XLA fuses these, no extra (B, D) HBM passes.
    log_det = jnp.sum(gamma) - 0.5 * jnp.sum(jnp.log(v))
    new_rm = (1.0 - momentum) * running_mean.astype(jnp.float32) + momentum * m
    new_rv = (1.0 - momentum) * running_var.astype(jnp.float32) + momentum * v
    return x_hat, log_det, new_rm, new_rv


if __name__ == "__main__":
    B, D = 8, 32
    key = jax.random.PRNGKey(0)
    kx, kg, kb = jax.random.split(key, 3)
    x = jax.random.normal(kx, (B, D), dtype=jnp.float32)

    # Module __init__ uses zeros; use small random gamma/beta to also exercise
    # the exp(gamma)/beta affine path (still deterministic).
    gamma = 0.1 * jax.random.normal(kg, (1, D), dtype=jnp.float32)
    beta = 0.1 * jax.random.normal(kb, (1, D), dtype=jnp.float32)
    running_mean = jnp.zeros((1, D), dtype=jnp.float32)
    running_var = jnp.ones((1, D), dtype=jnp.float32)

    x_hat, log_det, new_rm, new_rv = batch_norm_running_forward(
        x, gamma, beta, running_mean, running_var
    )
    jax.block_until_ready((x_hat, log_det, new_rm, new_rv))

    # Pure-JAX reference check (mirrors the PyTorch module's training branch).
    m_ref = jnp.mean(x, axis=0, keepdims=True)
    v_ref = jnp.var(x, axis=0, ddof=1, keepdims=True) + 1e-5
    xhat_ref = (x - m_ref) / jnp.sqrt(v_ref) * jnp.exp(gamma) + beta
    logdet_ref = jnp.sum(gamma) - 0.5 * jnp.sum(jnp.log(v_ref))
    rm_ref = 0.99 * running_mean + 0.01 * m_ref
    rv_ref = 0.99 * running_var + 0.01 * v_ref   # module folds eps into v before the update

    assert jnp.allclose(x_hat, xhat_ref, atol=1e-5, rtol=1e-5)
    assert jnp.allclose(log_det, logdet_ref, atol=1e-5, rtol=1e-5)
    assert jnp.allclose(new_rm, rm_ref, atol=1e-6)
    assert jnp.allclose(new_rv, rv_ref, atol=1e-6)
    print("KERNEL_OK")
</pallas_src>

<mosaic_0001>
module attributes {stable_mosaic.version = 11 : i64} {
  func.func @_bn_running_kernel(%arg0: i32, %arg1: memref<8x128xf32, #tpu.memory_space<vmem>>, %arg2: memref<1x128xf32, #tpu.memory_space<vmem>>, %arg3: memref<1x128xf32, #tpu.memory_space<vmem>>, %arg4: memref<8x128xf32, #tpu.memory_space<vmem>>, %arg5: memref<1x128xf32, #tpu.memory_space<vmem>>, %arg6: memref<1x128xf32, #tpu.memory_space<vmem>>) attributes {dimension_semantics = [#tpu.dimension_semantics<parallel>], iteration_bounds = array<i64: 1>, scalar_prefetch = 0 : i64, scratch_operands = 0 : i64, tpu.core_type = #tpu.core_type<tc>, window_params = [{transform_indices = @transform_0, window_bounds = array<i64: 8, 128>}, {transform_indices = @transform_1, window_bounds = array<i64: 1, 128>}, {transform_indices = @transform_2, window_bounds = array<i64: 1, 128>}, {transform_indices = @transform_3, window_bounds = array<i64: 8, 128>}, {transform_indices = @transform_4, window_bounds = array<i64: 1, 128>}, {transform_indices = @transform_5, window_bounds = array<i64: 1, 128>}]} {
    %c0 = arith.constant 0 : index
    %c0_0 = arith.constant 0 : index
    %0 = vector.load %arg1[%c0, %c0_0] : memref<8x128xf32, #tpu.memory_space<vmem>>, vector<8x128xf32>
    %c0_1 = arith.constant 0 : index
    %c0_2 = arith.constant 0 : index
    %1 = vector.load %arg2[%c0_1, %c0_2] : memref<1x128xf32, #tpu.memory_space<vmem>>, vector<1x128xf32>
    %c0_3 = arith.constant 0 : index
    %c0_4 = arith.constant 0 : index
    %2 = vector.load %arg3[%c0_3, %c0_4] : memref<1x128xf32, #tpu.memory_space<vmem>>, vector<1x128xf32>
    %cst = arith.constant dense<0.000000e+00> : vector<128xf32>
    %3 = vector.multi_reduction <add>, %0, %cst [0] : vector<8x128xf32> to vector<128xf32>
    %4 = vector.shape_cast %3 : vector<128xf32> to vector<1x128xf32>
    %cst_5 = arith.constant 1.250000e-01 : f32
    %5 = vector.broadcast %cst_5 : f32 to vector<1x128xf32>
    %6 = arith.mulf %4, %5 : vector<1x128xf32>
    %7 = vector.broadcast %6 : vector<1x128xf32> to vector<8x128xf32>
    %8 = arith.subf %0, %7 : vector<8x128xf32>
    %9 = arith.mulf %8, %8 : vector<8x128xf32>
    %cst_6 = arith.constant dense<0.000000e+00> : vector<128xf32>
    %10 = vector.multi_reduction <add>, %9, %cst_6 [0] : vector<8x128xf32> to vector<128xf32>
    %11 = vector.shape_cast %10 : vector<128xf32> to vector<1x128xf32>
    %cst_7 = arith.constant 0.142857149 : f32
    %12 = vector.broadcast %cst_7 : f32 to vector<1x128xf32>
    %13 = arith.mulf %11, %12 : vector<1x128xf32>
    %cst_8 = arith.constant 9.99999974E-6 : f32
    %14 = vector.broadcast %cst_8 : f32 to vector<1x128xf32>
    %15 = arith.addf %13, %14 : vector<1x128xf32>
    %16 = math.exp %1 : vector<1x128xf32>
    %17 = math.rsqrt %15 : vector<1x128xf32>
    %18 = arith.mulf %16, %17 : vector<1x128xf32>
    %19 = vector.broadcast %18 : vector<1x128xf32> to vector<8x128xf32>
    %20 = arith.mulf %8, %19 : vector<8x128xf32>
    %21 = vector.broadcast %2 : vector<1x128xf32> to vector<8x128xf32>
    %22 = arith.addf %20, %21 : vector<8x128xf32>
    %c0_9 = arith.constant 0 : index
    %c0_10 = arith.constant 0 : index
    %23 = vector.load %arg4[%c0_9, %c0_10] : memref<8x128xf32, #tpu.memory_space<vmem>>, vector<8x128xf32>
    tpu.vector_store %arg4[%c0_9, %c0_10], %22 {strides = array<i32>} : memref<8x128xf32, #tpu.memory_space<vmem>>, vector<8x128xf32>,
    %c0_11 = arith.constant 0 : index
    %c0_12 = arith.constant 0 : index
    %24 = vector.load %arg5[%c0_11, %c0_12] : memref<1x128xf32, #tpu.memory_space<vmem>>, vector<1x128xf32>
    tpu.vector_store %arg5[%c0_11, %c0_12], %6 {strides = array<i32>} : memref<1x128xf32, #tpu.memory_space<vmem>>, vector<1x128xf32>,
    %c0_13 = arith.constant 0 : index
    %c0_14 = arith.constant 0 : index
    %25 = vector.load %arg6[%c0_13, %c0_14] : memref<1x128xf32, #tpu.memory_space<vmem>>, vector<1x128xf32>
    tpu.vector_store %arg6[%c0_13, %c0_14], %15 {strides = array<i32>} : memref<1x128xf32, #tpu.memory_space<vmem>>, vector<1x128xf32>,
    return
  }
  func.func @transform_0(%arg0: i32) -> (i32, i32) {
    %c0_i32 = arith.constant 0 : i32
    %c0_i32_0 = arith.constant 0 : i32
    return %c0_i32, %arg0 : i32, i32
  }
  func.func @transform_1(%arg0: i32) -> (i32, i32) {
    %c0_i32 = arith.constant 0 : i32
    %c0_i32_0 = arith.constant 0 : i32
    return %c0_i32, %arg0 : i32, i32
  }
  func.func @transform_2(%arg0: i32) -> (i32, i32) {
    %c0_i32 = arith.constant 0 : i32
    %c0_i32_0 = arith.constant 0 : i32
    return %c0_i32, %arg0 : i32, i32
  }
  func.func @transform_3(%arg0: i32) -> (i32, i32) {
    %c0_i32 = arith.constant 0 : i32
    %c0_i32_0 = arith.constant 0 : i32
    return %c0_i32, %arg0 : i32, i32
  }
  func.func @transform_4(%arg0: i32) -> (i32, i32) {
    %c0_i32 = arith.constant 0 : i32
    %c0_i32_0 = arith.constant 0 : i32
    return %c0_i32, %arg0 : i32, i32
  }
  func.func @transform_5(%arg0: i32) -> (i32, i32) {
    %c0_i32 = arith.constant 0 : i32
    %c0_i32_0 = arith.constant 0 : i32
    return %c0_i32, %arg0 : i32, i32
  }
}

</mosaic_0001>

<llo_original>
// kernel: tpu_custom_call.1
$region0: #{tpu_custom_call.1}
  #allocation0 [shape = 'u32[]', space=smem, size = 0x4, offset = 0x4, fixed_abs, tag = 'smem constant byte address 0x4 - core index']
  #allocation1 [shape = 'u32[72,128]{1,0:T(1,128)}', space=vmem, size = 0x9000, scoped, tag = 'internal scratch']
  %s0 = inlined_call_operand.hbm [shape: f32[8,32], index: 0, kind: input, shape index: {}]
  %s1 = inlined_call_operand.hbm [shape: f32[1,32], index: 1, kind: input, shape index: {}]
  %s2 = inlined_call_operand.vmem [shape: f32[1,32], index: 2, kind: input, shape index: {}]
  %s3 = inlined_call_operand.hbm [shape: f32[8,32], index: 3, kind: output, shape index: {0}]
  %s4 = inlined_call_operand.hbm [shape: f32[1,32], index: 4, kind: output, shape index: {1}]
  %s5 = inlined_call_operand.hbm [shape: f32[1,32], index: 5, kind: output, shape index: {2}]
  %6 = xla_tuple %s3, %s4, %s5
  %s7 = sld [smem:[#allocation0]]
  $region46: #{tpu_custom_call.1} parent=0
    _
  %s9 = ssub.s32 1, %s7
  %s10 = scalar_select 0, %s9, %s7
  $region1: #{tpu_custom_call.1} parent=0
    #allocation2 [shape = 'u8[4096]{0}', space=vmem, size = 0x1000, scoped, tag = 'input window, operand 0, single buffered']
    #allocation3 [shape = 's32[1]{0}', space=sflag, size = 0x4, scoped, tag = 'scoped memory for tpu_custom_call.1']
    #allocation4 [shape = 's32[1]{0}', space=sflag, size = 0x4, scoped, tag = 'scoped memory for tpu_custom_call.1']
    #allocation5 [shape = 'u8[512]{0}', space=vmem, size = 0x400, scoped, tag = 'input window, operand 1, single buffered']
    #allocation6 [shape = 's32[1]{0}', space=sflag, size = 0x4, scoped, tag = 'scoped memory for tpu_custom_call.1']
    #allocation7 [shape = 'u8[4096]{0}', space=vmem, size = 0x1000, scoped, tag = 'output window, operand 0, single buffered']
    #allocation8 [shape = 'u8[512]{0}', space=vmem, size = 0x400, scoped, tag = 'output window, operand 1, single buffered']
    #allocation9 [shape = 's32[1]{0}', space=sflag, size = 0x4, scoped, tag = 'scoped memory for tpu_custom_call.1']
    #allocation10 [shape = 'u8[512]{0}', space=vmem, size = 0x400, scoped, tag = 'output window, operand 2, single buffered']
    %11 = vsyncpa [#allocation3], 0
    %12 = vsyncpa [#allocation6], 0
    %13 = vsyncpa [#allocation4], 0
    %14 = vsyncpa [#allocation9], 0
    // Predicated region
    $region2: #{tpu_custom_call.1} parent=1 // pred_check
      _
    $region3: #{tpu_custom_call.1} parent=1 // pred_check_branch
      %16 = sbr.rel (0) target = $region5
    $region4: #{tpu_custom_call.1} parent=1 // pred_region
      %18 = vsyncadd [#allocation3], 0
      %s20 = sshll.u32 %s0, 4
      %s21 = int_to_ptr.hbm [resolvable:$true] %s20
      %s22 = sshll.u32 [#allocation2], 4
      %s23 = int_to_ptr.vmem [resolvable:$true] %s22
      %25 = dma.hbm_to_vmem [thread:$0]  %s21, 128, %s23, [#allocation3]
    $region5: #{tpu_custom_call.1} parent=1 // pred_fallthru
      _
    // Predicated region
    $region6: #{tpu_custom_call.1} parent=1 // pred_check
      _
    $region7: #{tpu_custom_call.1} parent=1 // pred_check_branch
      %27 = sbr.rel (0) target = $region9
    $region8: #{tpu_custom_call.1} parent=1 // pred_region
      %29 = vsyncadd [#allocation6], 0
      %s31 = sshll.u32 %s1, 4
      %s32 = int_to_ptr.hbm [resolvable:$true] %s31
      %s33 = sshll.u32 [#allocation5], 4
      %s34 = int_to_ptr.vmem [resolvable:$true] %s33
      %36 = dma.hbm_to_vmem [thread:$0]  %s32, 16, %s34, [#allocation6]
    $region9: #{tpu_custom_call.1} parent=1 // pred_fallthru
      _
    // Predicated region
    $region10: #{tpu_custom_call.1} parent=1 // pred_check
      _
    $region11: #{tpu_custom_call.1} parent=1 // pred_check_branch
      %38 = sbr.rel (0) target = $region13
    $region12: #{tpu_custom_call.1} parent=1 // pred_region
      _
    $region13: #{tpu_custom_call.1} parent=1 // pred_fallthru
      _
    // Predicated region
    $region14: #{tpu_custom_call.1} parent=1 // pred_check
      _
    $region15: #{tpu_custom_call.1} parent=1 // pred_check_branch
      %40 = sbr.rel (0) target = $region17
    $region16: #{tpu_custom_call.1} parent=1 // pred_region
      %42 = dma.done [#allocation3], 128
    $region17: #{tpu_custom_call.1} parent=1 // pred_fallthru
      _
    // Predicated region
    $region18: #{tpu_custom_call.1} parent=1 // pred_check
      _
    $region19: #{tpu_custom_call.1} parent=1 // pred_check_branch
      %44 = sbr.rel (0) target = $region21
    $region20: #{tpu_custom_call.1} parent=1 // pred_region
      %46 = dma.done [#allocation6], 16
    $region21: #{tpu_custom_call.1} parent=1 // pred_fallthru
      _
    %v47 = vld [vmem:[#allocation2] sm:$0xff]
    %v48 = vld [vmem:[#allocation5] sm:$0x1]
    %v49 = vld [vmem:[%s2] sm:$0x1]
    %v50 = vrot.slane %v47, 4
    %v51 = vadd.f32 %v47, %v50
    %v52 = vrot.slane %v51, 2
    %v53 = vadd.f32 %v51, %v52
    %v54 = vrot.slane %v53, 1
    %v55 = vadd.f32 %v53, %v54
    %v56 = vmul.f32 %v55, 0.125
    %v57 = vsub.f32 %v47, %v56
    %v58 = vmul.f32 %v57, %v57
    %v59 = vrot.slane %v58, 4
    %v60 = vadd.f32 %v58, %v59
    %v61 = vrot.slane %v60, 2
    %v62 = vadd.f32 %v60, %v61
    %v63 = vrot.slane %v62, 1
    %v64 = vadd.f32 %v62, %v63
    %v65 = vmul.f32 %v64, 0.14285715
    %v66 = vadd.f32 %v65, 1e-05
    %v67 = vmul.f32 %v48, 1.442695
    %v68 = vpow.pop %v67
    %v69 = vrsqrt.pop %v66
    %v70 = vmul.f32 %v69, %v66
    %v71 = vmul.f32 %v70, %v69
    %v72 = vmul.f32 0.5, %v71
    %v73 = vsub.f32 1.5, %v72
    %v74 = vmul.f32 %v69, %v73
    %vm75 = vweird.f32 %v66
    %vm76 = vweird.f32 %v69
    %vm77 = vmor %vm75, %vm76
    %v78 = vsel %vm77, %v69, %v74
    %v79 = vmul.f32 %v68, %v78
    %v81 = vperm.slane %v79, 0
    %v83 = vmul.f32 %v57, %v81
    %v85 = vperm.slane %v49, 0
    %v87 = vadd.f32 %v83, %v85
    %88 = vst [vmem:[#allocation7] sm:$0xff] %v87
    %89 = vst [vmem:[#allocation8] sm:$0x1] %v56
    %90 = vst [vmem:[#allocation10] sm:$0x1] %v66
    // Predicated region
    $region22: #{tpu_custom_call.1} parent=1 // pred_check
      _
    $region23: #{tpu_custom_call.1} parent=1 // pred_check_branch
      %92 = sbr.rel (0) target = $region25
    $region24: #{tpu_custom_call.1} parent=1 // pred_region
      %94 = vsyncadd [#allocation4], 0
      %s96 = sshll.u32 [#allocation7], 4
      %s97 = int_to_ptr.vmem [resolvable:$true] %s96
      %s98 = sshll.u32 %s3, 4
      %s99 = int_to_ptr.hbm [resolvable:$true] %s98
      %101 = dma.vmem_to_hbm [thread:$0]  %s97, 128, %s99, [#allocation4]
    $region25: #{tpu_custom_call.1} parent=1 // pred_fallthru
      _
    // Predicated region
    $region26: #{tpu_custom_call.1} parent=1 // pred_check
      _
    $region27: #{tpu_custom_call.1} parent=1 // pred_check_branch
      %103 = sbr.rel (0) target = $region29
    $region28: #{tpu_custom_call.1} parent=1 // pred_region
      %105 = vsyncadd [#allocation9], 0
      %s107 = sshll.u32 [#allocation8], 4
      %s108 = int_to_ptr.vmem [resolvable:$true] %s107
      %s109 = sshll.u32 %s4, 4
      %s110 = int_to_ptr.hbm [resolvable:$true] %s109
      %112 = dma.vmem_to_hbm [thread:$0]  %s108, 16, %s110, [#allocation9]
    $region29: #{tpu_custom_call.1} parent=1 // pred_fallthru
      _
    // Predicated region
    $region30: #{tpu_custom_call.1} parent=1 // pred_check
      _
    $region31: #{tpu_custom_call.1} parent=1 // pred_check_branch
      %114 = sbr.rel (0) target = $region33
    $region32: #{tpu_custom_call.1} parent=1 // pred_region
      %116 = vsyncadd [#allocation9], 0
      %s118 = sshll.u32 [#allocation10], 4
      %s119 = int_to_ptr.vmem [resolvable:$true] %s118
      %s120 = sshll.u32 %s5, 4
      %s121 = int_to_ptr.hbm [resolvable:$true] %s120
      %123 = dma.vmem_to_hbm [thread:$0]  %s119, 16, %s121, [#allocation9]
    $region33: #{tpu_custom_call.1} parent=1 // pred_fallthru
      _
    // Predicated region
    $region34: #{tpu_custom_call.1} parent=1 // pred_check
      _
    $region35: #{tpu_custom_call.1} parent=1 // pred_check_branch
      %125 = sbr.rel (0) target = $region37
    $region36: #{tpu_custom_call.1} parent=1 // pred_region
      %127 = dma.done [#allocation4], 128
    $region37: #{tpu_custom_call.1} parent=1 // pred_fallthru
      _
    // Predicated region
    $region38: #{tpu_custom_call.1} parent=1 // pred_check
      _
    $region39: #{tpu_custom_call.1} parent=1 // pred_check_branch
      %129 = sbr.rel (0) target = $region41
    $region40: #{tpu_custom_call.1} parent=1 // pred_region
      %131 = dma.done [#allocation9], 16
    $region41: #{tpu_custom_call.1} parent=1 // pred_fallthru
      _
    // Predicated region
    $region42: #{tpu_custom_call.1} parent=1 // pred_check
      _
    $region43: #{tpu_custom_call.1} parent=1 // pred_check_branch
      %133 = sbr.rel (0) target = $region45
    $region44: #{tpu_custom_call.1} parent=1 // pred_region
      %135 = dma.done [#allocation9], 16
    $region45: #{tpu_custom_call.1} parent=1 // pred_fallthru
      _
    %136 = vsyncpa [#allocation3], 1
    %137 = vsyncpa [#allocation6], 1
    %138 = vsyncpa [#allocation4], 1
    %139 = vsyncpa [#allocation9], 1

</llo_original>
